<compile_context>
chip_gen: v7x
topology: tpu7x:2x2x1
jax: 0.10.0
libtpu: 0.0.40
codegen_flags: <defaults>
</compile_context>

<pallas_src>
import jax
import jax.numpy as jnp
from jax.experimental import pallas as pl
from jax.experimental.pallas import tpu as pltpu

IN_FEATURES = 3     # Pendulum-v0 observation: (cos th, sin th, th_dot)
HIDDEN = 100        # fc output features (real)
HIDDEN_PAD = 128    # hidden rows padded to a full sublane multiple
W_COLS = 8          # packed weight slab columns: 3 x W1^T | b1 | w2 | b2 | 0 | 0
COL_B1 = IN_FEATURES          # 3
COL_W2 = IN_FEATURES + 1      # 4
COL_B2 = IN_FEATURES + 2      # 5


def critic_kernel(x_ref, w_ref, out_ref):
    x = x_ref[...]                       # (3, tb) f32 — batch on lanes
    w = w_ref[...]                       # (128, 8): cols 0..2 = W1^T, 3 = b1, 4 = w2, 5 = b2
    # fc: Linear(3, 100->128) as three broadcast FMAs on the VPU
    # (K=3 is far too shallow for the MXU).  h has hidden on sublanes,
    # batch on lanes -> (128, tb).
    h = (w[:, 0:1] * x[0:1, :]
         + w[:, 1:2] * x[1:2, :]
         + w[:, 2:3] * x[2:3, :]
         + w[:, COL_B1:COL_B1 + 1])
    h = jnp.maximum(h, 0.0)              # padded hidden rows stay exactly 0
    # v_head: Linear(100->128, 1) as a VPU multiply + sublane (XLU) reduce
    # against the single w2 column — no MXU, no dead output columns.
    v = jnp.sum(h * w[:, COL_W2:COL_W2 + 1], axis=0, keepdims=True)   # (1, tb)
    out_ref[...] = v + w[0:1, COL_B2:COL_B2 + 1]   # lane-dense (1, tb) store


def _round_up(n, m):
    return ((n + m - 1) // m) * m


def critic_net_forward(x, wslab, *, block_b=2048):
    """x: (B, 3) float32 -> state value (B, 1) float32."""
    B = x.shape[0]
    if B == 0:
        return jnp.zeros((0, 1), jnp.float32)

    tb = min(block_b, _round_up(B, 128))    # batch tile, multiple of 128 lanes
    bp = _round_up(B, tb)
    xt = x.T                                # (3, B): contiguous rows of 4*B bytes
    if bp != B:
        xt = jnp.pad(xt, ((0, 0), (0, bp - B)))
    grid = (bp // tb,)

    out = pl.pallas_call(
        critic_kernel,
        out_shape=jax.ShapeDtypeStruct((1, bp), jnp.float32),
        grid_spec=pltpu.PrefetchScalarGridSpec(
            num_scalar_prefetch=0,
            grid=grid,
            in_specs=[
                pl.BlockSpec((IN_FEATURES, tb), lambda i: (0, i)),
                pl.BlockSpec((HIDDEN_PAD, W_COLS), lambda i: (0, 0)),
            ],
            out_specs=pl.BlockSpec((1, tb), lambda i: (0, i)),
        ),
        compiler_params=pltpu.CompilerParams(
            dimension_semantics=("parallel",),
            vmem_limit_bytes=32 * 1024 * 1024),
        cost_estimate=pl.CostEstimate(
            # fc FMAs + relu + v_head multiply/reduce on padded dims.
            flops=bp * HIDDEN_PAD * (2 * IN_FEATURES + 1 + 2),
            transcendentals=0,
            bytes_accessed=4 * (IN_FEATURES * bp + int(wslab.size) + bp),
        ),
    )(xt, wslab)
    return out[0, :B].reshape(B, 1)


def init_params(key):
    """Deterministic init mimicking nn.Linear's U(-1/sqrt(fan_in), +)."""
    k1, k2, k3, k4 = jax.random.split(key, 4)
    bound1 = 1.0 / jnp.sqrt(jnp.float32(IN_FEATURES))
    bound2 = 1.0 / jnp.sqrt(jnp.float32(HIDDEN))
    # weights stored (in_features, out_features), i.e. transposed vs PyTorch
    w1 = jax.random.uniform(k1, (IN_FEATURES, HIDDEN), jnp.float32, -bound1, bound1)
    b1 = jax.random.uniform(k2, (HIDDEN,), jnp.float32, -bound1, bound1)
    w2 = jax.random.uniform(k3, (HIDDEN, 1), jnp.float32, -bound2, bound2)
    b2 = jax.random.uniform(k4, (1,), jnp.float32, -bound2, bound2)
    return w1, b1, w2, b2


def pack_params(w1, b1, w2, b2):
    """One (128, 8) slab, hidden on sublanes: W1^T | b1 | w2 | b2, zero-padded."""
    w = jnp.zeros((HIDDEN_PAD, W_COLS), jnp.float32)
    w = w.at[:HIDDEN, :IN_FEATURES].set(w1.T)        # W1^T: (100, 3)
    w = w.at[:HIDDEN, COL_B1].set(b1)                # bias of fc
    w = w.at[:HIDDEN, COL_W2].set(w2[:, 0])          # v_head weight column
    w = w.at[0, COL_B2].set(b2[0])                   # v_head bias scalar
    return w


if __name__ == "__main__":
    key = jax.random.PRNGKey(0)
    kx, kx2, kp = jax.random.split(key, 3)

    w1, b1, w2, b2 = init_params(kp)
    wslab = pack_params(w1, b1, w2, b2)

    def ref_forward(x):
        # Pure-jnp reference of CriticNet.forward: relu(fc(x)) -> v_head
        return jnp.maximum(x @ w1 + b1, 0.0) @ w2 + b2

    # Small batch (single grid step, batch padded 8 -> 128 lanes).
    B = 8
    x = jax.random.normal(kx, (B, IN_FEATURES), jnp.float32)
    value = jax.block_until_ready(critic_net_forward(x, wslab))
    assert value.shape == (B, 1)
    assert bool(jnp.all(jnp.abs(value - ref_forward(x)) < 1e-4)), "mismatch (B=8)"

    # Ragged batch with a multi-step grid (tests padding + pipelining path).
    B2 = 300
    x2 = jax.random.normal(kx2, (B2, IN_FEATURES), jnp.float32)
    value2 = jax.block_until_ready(critic_net_forward(x2, wslab, block_b=128))
    assert value2.shape == (B2, 1)
    assert bool(jnp.all(jnp.abs(value2 - ref_forward(x2)) < 1e-4)), "mismatch (B=300)"

    print("KERNEL_OK")
</pallas_src>

<mosaic_0001>
module attributes {stable_mosaic.version = 11 : i64} {
  func.func @critic_kernel(%arg0: i32, %arg1: memref<3x128xf32, #tpu.memory_space<vmem>>, %arg2: memref<128x8xf32, #tpu.memory_space<vmem>>, %arg3: memref<1x128xf32, #tpu.memory_space<vmem>>) attributes {dimension_semantics = [#tpu.dimension_semantics<parallel>], iteration_bounds = array<i64: 1>, scalar_prefetch = 0 : i64, scratch_operands = 0 : i64, tpu.core_type = #tpu.core_type<tc>, window_params = [{transform_indices = @transform_0, window_bounds = array<i64: 3, 128>}, {pipeline_mode = #tpu.pipeline_mode<synchronous>, transform_indices = @transform_1, window_bounds = array<i64: 128, 8>}, {transform_indices = @transform_2, window_bounds = array<i64: 1, 128>}]} {
    %c0 = arith.constant 0 : index
    %c0_0 = arith.constant 0 : index
    %0 = vector.load %arg1[%c0, %c0_0] : memref<3x128xf32, #tpu.memory_space<vmem>>, vector<3x128xf32>
    %c0_1 = arith.constant 0 : index
    %c0_2 = arith.constant 0 : index
    %1 = vector.load %arg2[%c0_1, %c0_2] : memref<128x8xf32, #tpu.memory_space<vmem>>, vector<128x8xf32>
    %2 = vector.extract_strided_slice %1 {offsets = [0, 0], sizes = [128, 1], strides = [1, 1]} : vector<128x8xf32> to vector<128x1xf32>
    %3 = vector.extract_strided_slice %0 {offsets = [0, 0], sizes = [1, 128], strides = [1, 1]} : vector<3x128xf32> to vector<1x128xf32>
    %4 = vector.broadcast %2 : vector<128x1xf32> to vector<128x128xf32>
    %5 = vector.broadcast %3 : vector<1x128xf32> to vector<128x128xf32>
    %6 = arith.mulf %4, %5 : vector<128x128xf32>
    %7 = vector.extract_strided_slice %1 {offsets = [0, 1], sizes = [128, 1], strides = [1, 1]} : vector<128x8xf32> to vector<128x1xf32>
    %8 = vector.extract_strided_slice %0 {offsets = [1, 0], sizes = [1, 128], strides = [1, 1]} : vector<3x128xf32> to vector<1x128xf32>
    %9 = vector.broadcast %7 : vector<128x1xf32> to vector<128x128xf32>
    %10 = vector.broadcast %8 : vector<1x128xf32> to vector<128x128xf32>
    %11 = arith.mulf %9, %10 : vector<128x128xf32>
    %12 = arith.addf %6, %11 : vector<128x128xf32>
    %13 = vector.extract_strided_slice %1 {offsets = [0, 2], sizes = [128, 1], strides = [1, 1]} : vector<128x8xf32> to vector<128x1xf32>
    %14 = vector.extract_strided_slice %0 {offsets = [2, 0], sizes = [1, 128], strides = [1, 1]} : vector<3x128xf32> to vector<1x128xf32>
    %15 = vector.broadcast %13 : vector<128x1xf32> to vector<128x128xf32>
    %16 = vector.broadcast %14 : vector<1x128xf32> to vector<128x128xf32>
    %17 = arith.mulf %15, %16 : vector<128x128xf32>
    %18 = arith.addf %12, %17 : vector<128x128xf32>
    %19 = vector.extract_strided_slice %1 {offsets = [0, 3], sizes = [128, 1], strides = [1, 1]} : vector<128x8xf32> to vector<128x1xf32>
    %20 = vector.broadcast %19 : vector<128x1xf32> to vector<128x128xf32>
    %21 = arith.addf %18, %20 : vector<128x128xf32>
    %cst = arith.constant 0.000000e+00 : f32
    %22 = vector.broadcast %cst : f32 to vector<128x128xf32>
    %23 = arith.maximumf %21, %22 : vector<128x128xf32>
    %24 = vector.extract_strided_slice %1 {offsets = [0, 4], sizes = [128, 1], strides = [1, 1]} : vector<128x8xf32> to vector<128x1xf32>
    %25 = vector.broadcast %24 : vector<128x1xf32> to vector<128x128xf32>
    %26 = arith.mulf %23, %25 : vector<128x128xf32>
    %cst_3 = arith.constant dense<0.000000e+00> : vector<128xf32>
    %27 = vector.multi_reduction <add>, %26, %cst_3 [0] : vector<128x128xf32> to vector<128xf32>
    %28 = vector.shape_cast %27 : vector<128xf32> to vector<1x128xf32>
    %29 = vector.extract_strided_slice %1 {offsets = [0, 5], sizes = [1, 1], strides = [1, 1]} : vector<128x8xf32> to vector<1x1xf32>
    %30 = vector.broadcast %29 : vector<1x1xf32> to vector<1x128xf32>
    %31 = arith.addf %28, %30 : vector<1x128xf32>
    %c0_4 = arith.constant 0 : index
    %c0_5 = arith.constant 0 : index
    %32 = vector.load %arg3[%c0_4, %c0_5] : memref<1x128xf32, #tpu.memory_space<vmem>>, vector<1x128xf32>
    tpu.vector_store %arg3[%c0_4, %c0_5], %31 {strides = array<i32>} : memref<1x128xf32, #tpu.memory_space<vmem>>, vector<1x128xf32>,
    return
  }
  func.func @transform_0(%arg0: i32) -> (i32, i32) {
    %c0_i32 = arith.constant 0 : i32
    %c0_i32_0 = arith.constant 0 : i32
    return %c0_i32, %arg0 : i32, i32
  }
  func.func @transform_1(%arg0: i32) -> (i32, i32) {
    %c0_i32 = arith.constant 0 : i32
    %c0_i32_0 = arith.constant 0 : i32
    %c0_i32_1 = arith.constant 0 : i32
    return %c0_i32, %c0_i32_0 : i32, i32
  }
  func.func @transform_2(%arg0: i32) -> (i32, i32) {
    %c0_i32 = arith.constant 0 : i32
    %c0_i32_0 = arith.constant 0 : i32
    return %c0_i32, %arg0 : i32, i32
  }
}

</mosaic_0001>

<llo_original>
// kernel: tpu_custom_call.1
$region0: #{tpu_custom_call.1}
  #allocation0 [shape = 'u32[]', space=smem, size = 0x4, offset = 0x4, fixed_abs, tag = 'smem constant byte address 0x4 - core index']
  #allocation1 [shape = 'u32[144,128]{1,0:T(1,128)}', space=vmem, size = 0x12000, scoped, tag = 'internal scratch']
  %s0 = inlined_call_operand.vmem [shape: f32[3,128], index: 0, kind: input, shape index: {}]
  %s1 = inlined_call_operand.vmem [shape: f32[128,8], index: 1, kind: input, shape index: {}]
  %s2 = inlined_call_operand.hbm [shape: f32[1,128], index: 2, kind: output, shape index: {}]
  %s3 = sld [smem:[#allocation0]]
  $region18: #{tpu_custom_call.1} parent=0
    _
  %s5 = ssub.s32 1, %s3
  %s6 = scalar_select 0, %s5, %s3
  $region1: #{tpu_custom_call.1} parent=0
    #allocation2 [shape = 'u8[512]{0}', space=vmem, size = 0x400, scoped, tag = 'output window, operand 0, single buffered']
    #allocation3 [shape = 's32[1]{0}', space=sflag, size = 0x4, scoped, tag = 'scoped memory for tpu_custom_call.1']
    %7 = vsyncpa [#allocation3], 0
    // Predicated region
    $region2: #{tpu_custom_call.1} parent=1 // pred_check
      _
    $region3: #{tpu_custom_call.1} parent=1 // pred_check_branch
      %9 = sbr.rel (0) target = $region5
    $region4: #{tpu_custom_call.1} parent=1 // pred_region
      _
    $region5: #{tpu_custom_call.1} parent=1 // pred_fallthru
      _
    // Predicated region
    $region6: #{tpu_custom_call.1} parent=1 // pred_check
      _
    $region7: #{tpu_custom_call.1} parent=1 // pred_check_branch
      %11 = sbr.rel (0) target = $region9
    $region8: #{tpu_custom_call.1} parent=1 // pred_region
      _
    $region9: #{tpu_custom_call.1} parent=1 // pred_fallthru
      _
    %v12 = vld [vmem:[%s0] sm:$0x7]
    %v13 = vld [vmem:[%s1] sm:$0xff]
    %v14 = vld [vmem:[%s1 + $0x8] sm:$0xff]
    %v15 = vld [vmem:[%s1 + $0x10] sm:$0xff]
    %v16 = vld [vmem:[%s1 + $0x18] sm:$0xff]
    %v17 = vld [vmem:[%s1 + $0x20] sm:$0xff]
    %v18 = vld [vmem:[%s1 + $0x28] sm:$0xff]
    %v19 = vld [vmem:[%s1 + $0x30] sm:$0xff]
    %v20 = vld [vmem:[%s1 + $0x38] sm:$0xff]
    %v21 = vld [vmem:[%s1 + $0x40] sm:$0xff]
    %v22 = vld [vmem:[%s1 + $0x48] sm:$0xff]
    %v23 = vld [vmem:[%s1 + $0x50] sm:$0xff]
    %v24 = vld [vmem:[%s1 + $0x58] sm:$0xff]
    %v25 = vld [vmem:[%s1 + $0x60] sm:$0xff]
    %v26 = vld [vmem:[%s1 + $0x68] sm:$0xff]
    %v27 = vld [vmem:[%s1 + $0x70] sm:$0xff]
    %v28 = vld [vmem:[%s1 + $0x78] sm:$0xff]
    %30 = vset.pattern.permute.xlu0 0
    %31 = vperm.xlu0 %30, %v13
    %v32 = vpop.permute.xlu0 %31
    %35 = vset.pattern.permute.xlu0 0
    %36 = vperm.xlu0 %35, %v14
    %v37 = vpop.permute.xlu0 %36
    %40 = vset.pattern.permute.xlu0 0
    %41 = vperm.xlu0 %40, %v15
    %v42 = vpop.permute.xlu0 %41
    %45 = vset.pattern.permute.xlu0 0
    %46 = vperm.xlu0 %45, %v16
    %v47 = vpop.permute.xlu0 %46
    %50 = vset.pattern.permute.xlu0 0
    %51 = vperm.xlu0 %50, %v17
    %v52 = vpop.permute.xlu0 %51
    %55 = vset.pattern.permute.xlu0 0
    %56 = vperm.xlu0 %55, %v18
    %v57 = vpop.permute.xlu0 %56
    %60 = vset.pattern.permute.xlu0 0
    %61 = vperm.xlu0 %60, %v19
    %v62 = vpop.permute.xlu0 %61
    %65 = vset.pattern.permute.xlu0 0
    %66 = vperm.xlu0 %65, %v20
    %v67 = vpop.permute.xlu0 %66
    %70 = vset.pattern.permute.xlu0 0
    %71 = vperm.xlu0 %70, %v21
    %v72 = vpop.permute.xlu0 %71
    %75 = vset.pattern.permute.xlu0 0
    %76 = vperm.xlu0 %75, %v22
    %v77 = vpop.permute.xlu0 %76
    %80 = vset.pattern.permute.xlu0 0
    %81 = vperm.xlu0 %80, %v23
    %v82 = vpop.permute.xlu0 %81
    %85 = vset.pattern.permute.xlu0 0
    %86 = vperm.xlu0 %85, %v24
    %v87 = vpop.permute.xlu0 %86
    %90 = vset.pattern.permute.xlu0 0
    %91 = vperm.xlu0 %90, %v25
    %v92 = vpop.permute.xlu0 %91
    %95 = vset.pattern.permute.xlu0 0
    %96 = vperm.xlu0 %95, %v26
    %v97 = vpop.permute.xlu0 %96
    %100 = vset.pattern.permute.xlu0 0
    %101 = vperm.xlu0 %100, %v27
    %v102 = vpop.permute.xlu0 %101
    %105 = vset.pattern.permute.xlu0 0
    %106 = vperm.xlu0 %105, %v28
    %v107 = vpop.permute.xlu0 %106
    %v109 = vlaneseq
    %v110 = vshrl.u32 %v109, 7
    %v111 = vsub.s32 0, %v110
    %v112 = vrot.slane %v12, %v111
    %v113 = vmul.f32 %v32, %v112
    %v114 = vmul.f32 %v37, %v112
    %v115 = vmul.f32 %v42, %v112
    %v116 = vmul.f32 %v47, %v112
    %v117 = vmul.f32 %v52, %v112
    %v118 = vmul.f32 %v57, %v112
    %v119 = vmul.f32 %v62, %v112
    %v120 = vmul.f32 %v67, %v112
    %v121 = vmul.f32 %v72, %v112
    %v122 = vmul.f32 %v77, %v112
    %v123 = vmul.f32 %v82, %v112
    %v124 = vmul.f32 %v87, %v112
    %v125 = vmul.f32 %v92, %v112
    %v126 = vmul.f32 %v97, %v112
    %v127 = vmul.f32 %v102, %v112
    %v128 = vmul.f32 %v107, %v112
    %129 = vset.pattern.permute.xlu0 1
    %130 = vperm.xlu0 %129, %v13
    %v131 = vpop.permute.xlu0 %130
    %133 = vset.pattern.permute.xlu0 1
    %134 = vperm.xlu0 %133, %v14
    %v135 = vpop.permute.xlu0 %134
    %137 = vset.pattern.permute.xlu0 1
    %138 = vperm.xlu0 %137, %v15
    %v139 = vpop.permute.xlu0 %138
    %141 = vset.pattern.permute.xlu0 1
    %142 = vperm.xlu0 %141, %v16
    %v143 = vpop.permute.xlu0 %142
    %145 = vset.pattern.permute.xlu0 1
    %146 = vperm.xlu0 %145, %v17
    %v147 = vpop.permute.xlu0 %146
    %149 = vset.pattern.permute.xlu0 1
    %150 = vperm.xlu0 %149, %v18
    %v151 = vpop.permute.xlu0 %150
    %153 = vset.pattern.permute.xlu0 1
    %154 = vperm.xlu0 %153, %v19
    %v155 = vpop.permute.xlu0 %154
    %157 = vset.pattern.permute.xlu0 1
    %158 = vperm.xlu0 %157, %v20
    %v159 = vpop.permute.xlu0 %158
    %161 = vset.pattern.permute.xlu0 1
    %162 = vperm.xlu0 %161, %v21
    %v163 = vpop.permute.xlu0 %162
    %165 = vset.pattern.permute.xlu0 1
    %166 = vperm.xlu0 %165, %v22
    %v167 = vpop.permute.xlu0 %166
    %169 = vset.pattern.permute.xlu0 1
    %170 = vperm.xlu0 %169, %v23
    %v171 = vpop.permute.xlu0 %170
    %173 = vset.pattern.permute.xlu0 1
    %174 = vperm.xlu0 %173, %v24
    %v175 = vpop.permute.xlu0 %174
    %177 = vset.pattern.permute.xlu0 1
    %178 = vperm.xlu0 %177, %v25
    %v179 = vpop.permute.xlu0 %178
    %181 = vset.pattern.permute.xlu0 1
    %182 = vperm.xlu0 %181, %v26
    %v183 = vpop.permute.xlu0 %182
    %185 = vset.pattern.permute.xlu0 1
    %186 = vperm.xlu0 %185, %v27
    %v187 = vpop.permute.xlu0 %186
    %189 = vset.pattern.permute.xlu0 1
    %190 = vperm.xlu0 %189, %v28
    %v191 = vpop.permute.xlu0 %190
    %v193 = vlaneseq
    %v194 = vshrl.u32 %v193, 7
    %v195 = vsub.s32 1, %v194
    %v196 = vrot.slane %v12, %v195
    %v197 = vmul.f32 %v131, %v196
    %v198 = vmul.f32 %v135, %v196
    %v199 = vmul.f32 %v139, %v196
    %v200 = vmul.f32 %v143, %v196
    %v201 = vmul.f32 %v147, %v196
    %v202 = vmul.f32 %v151, %v196
    %v203 = vmul.f32 %v155, %v196
    %v204 = vmul.f32 %v159, %v196
    %v205 = vmul.f32 %v163, %v196
    %v206 = vmul.f32 %v167, %v196
    %v207 = vmul.f32 %v171, %v196
    %v208 = vmul.f32 %v175, %v196
    %v209 = vmul.f32 %v179, %v196
    %v210 = vmul.f32 %v183, %v196
    %v211 = vmul.f32 %v187, %v196
    %v212 = vmul.f32 %v191, %v196
    %v213 = vadd.f32 %v113, %v197
    %v214 = vadd.f32 %v114, %v198
    %v215 = vadd.f32 %v115, %v199
    %v216 = vadd.f32 %v116, %v200
    %v217 = vadd.f32 %v117, %v201
    %v218 = vadd.f32 %v118, %v202
    %v219 = vadd.f32 %v119, %v203
    %v220 = vadd.f32 %v120, %v204
    %v221 = vadd.f32 %v121, %v205
    %v222 = vadd.f32 %v122, %v206
    %v223 = vadd.f32 %v123, %v207
    %v224 = vadd.f32 %v124, %v208
    %v225 = vadd.f32 %v125, %v209
    %v226 = vadd.f32 %v126, %v210
    %v227 = vadd.f32 %v127, %v211
    %v228 = vadd.f32 %v128, %v212
    %229 = vset.pattern.permute.xlu0 2
    %230 = vperm.xlu0 %229, %v13
    %v231 = vpop.permute.xlu0 %230
    %233 = vset.pattern.permute.xlu0 2
    %234 = vperm.xlu0 %233, %v14
    %v235 = vpop.permute.xlu0 %234
    %237 = vset.pattern.permute.xlu0 2
    %238 = vperm.xlu0 %237, %v15
    %v239 = vpop.permute.xlu0 %238
    %241 = vset.pattern.permute.xlu0 2
    %242 = vperm.xlu0 %241, %v16
    %v243 = vpop.permute.xlu0 %242
    %245 = vset.pattern.permute.xlu0 2
    %246 = vperm.xlu0 %245, %v17
    %v247 = vpop.permute.xlu0 %246
    %249 = vset.pattern.permute.xlu0 2
    %250 = vperm.xlu0 %249, %v18
    %v251 = vpop.permute.xlu0 %250
    %253 = vset.pattern.permute.xlu0 2
    %254 = vperm.xlu0 %253, %v19
    %v255 = vpop.permute.xlu0 %254
    %257 = vset.pattern.permute.xlu0 2
    %258 = vperm.xlu0 %257, %v20
    %v259 = vpop.permute.xlu0 %258
    %261 = vset.pattern.permute.xlu0 2
    %262 = vperm.xlu0 %261, %v21
    %v263 = vpop.permute.xlu0 %262
    %265 = vset.pattern.permute.xlu0 2
    %266 = vperm.xlu0 %265, %v22
    %v267 = vpop.permute.xlu0 %266
    %269 = vset.pattern.permute.xlu0 2
    %270 = vperm.xlu0 %269, %v23
    %v271 = vpop.permute.xlu0 %270
    %273 = vset.pattern.permute.xlu0 2
    %274 = vperm.xlu0 %273, %v24
    %v275 = vpop.permute.xlu0 %274
    %277 = vset.pattern.permute.xlu0 2
    %278 = vperm.xlu0 %277, %v25
    %v279 = vpop.permute.xlu0 %278
    %281 = vset.pattern.permute.xlu0 2
    %282 = vperm.xlu0 %281, %v26
    %v283 = vpop.permute.xlu0 %282
    %285 = vset.pattern.permute.xlu0 2
    %286 = vperm.xlu0 %285, %v27
    %v287 = vpop.permute.xlu0 %286
    %289 = vset.pattern.permute.xlu0 2
    %290 = vperm.xlu0 %289, %v28
    %v291 = vpop.permute.xlu0 %290
    %v293 = vlaneseq
    %v294 = vshrl.u32 %v293, 7
    %v295 = vsub.s32 2, %v294
    %v296 = vrot.slane %v12, %v295
    %v297 = vmul.f32 %v231, %v296
    %v298 = vmul.f32 %v235, %v296
    %v299 = vmul.f32 %v239, %v296
    %v300 = vmul.f32 %v243, %v296
    %v301 = vmul.f32 %v247, %v296
    %v302 = vmul.f32 %v251, %v296
    %v303 = vmul.f32 %v255, %v296
    %v304 = vmul.f32 %v259, %v296
    %v305 = vmul.f32 %v263, %v296
    %v306 = vmul.f32 %v267, %v296
    %v307 = vmul.f32 %v271, %v296
    %v308 = vmul.f32 %v275, %v296
    %v309 = vmul.f32 %v279, %v296
    %v310 = vmul.f32 %v283, %v296
    %v311 = vmul.f32 %v287, %v296
    %v312 = vmul.f32 %v291, %v296
    %v313 = vadd.f32 %v213, %v297
    %v314 = vadd.f32 %v214, %v298
    %v315 = vadd.f32 %v215, %v299
    %v316 = vadd.f32 %v216, %v300
    %v317 = vadd.f32 %v217, %v301
    %v318 = vadd.f32 %v218, %v302
    %v319 = vadd.f32 %v219, %v303
    %v320 = vadd.f32 %v220, %v304
    %v321 = vadd.f32 %v221, %v305
    %v322 = vadd.f32 %v222, %v306
    %v323 = vadd.f32 %v223, %v307
    %v324 = vadd.f32 %v224, %v308
    %v325 = vadd.f32 %v225, %v309
    %v326 = vadd.f32 %v226, %v310
    %v327 = vadd.f32 %v227, %v311
    %v328 = vadd.f32 %v228, %v312
    %329 = vset.pattern.permute.xlu0 3
    %330 = vperm.xlu0 %329, %v13
    %v331 = vpop.permute.xlu0 %330
    %333 = vset.pattern.permute.xlu0 3
    %334 = vperm.xlu0 %333, %v14
    %v335 = vpop.permute.xlu0 %334
    %337 = vset.pattern.permute.xlu0 3
    %338 = vperm.xlu0 %337, %v15
    %v339 = vpop.permute.xlu0 %338
    %341 = vset.pattern.permute.xlu0 3
    %342 = vperm.xlu0 %341, %v16
    %v343 = vpop.permute.xlu0 %342
    %345 = vset.pattern.permute.xlu0 3
    %346 = vperm.xlu0 %345, %v17
    %v347 = vpop.permute.xlu0 %346
    %349 = vset.pattern.permute.xlu0 3
    %350 = vperm.xlu0 %349, %v18
    %v351 = vpop.permute.xlu0 %350
    %353 = vset.pattern.permute.xlu0 3
    %354 = vperm.xlu0 %353, %v19
    %v355 = vpop.permute.xlu0 %354
    %357 = vset.pattern.permute.xlu0 3
    %358 = vperm.xlu0 %357, %v20
    %v359 = vpop.permute.xlu0 %358
    %361 = vset.pattern.permute.xlu0 3
    %362 = vperm.xlu0 %361, %v21
    %v363 = vpop.permute.xlu0 %362
    %365 = vset.pattern.permute.xlu0 3
    %366 = vperm.xlu0 %365, %v22
    %v367 = vpop.permute.xlu0 %366
    %369 = vset.pattern.permute.xlu0 3
    %370 = vperm.xlu0 %369, %v23
    %v371 = vpop.permute.xlu0 %370
    %373 = vset.pattern.permute.xlu0 3
    %374 = vperm.xlu0 %373, %v24
    %v375 = vpop.permute.xlu0 %374
    %377 = vset.pattern.permute.xlu0 3
    %378 = vperm.xlu0 %377, %v25
    %v379 = vpop.permute.xlu0 %378
    %381 = vset.pattern.permute.xlu0 3
    %382 = vperm.xlu0 %381, %v26
    %v383 = vpop.permute.xlu0 %382
    %385 = vset.pattern.permute.xlu0 3
    %386 = vperm.xlu0 %385, %v27
    %v387 = vpop.permute.xlu0 %386
    %389 = vset.pattern.permute.xlu0 3
    %390 = vperm.xlu0 %389, %v28
    %v391 = vpop.permute.xlu0 %390
    %v393 = vadd.f32 %v313, %v331
    %v394 = vadd.f32 %v314, %v335
    %v395 = vadd.f32 %v315, %v339
    %v396 = vadd.f32 %v316, %v343
    %v397 = vadd.f32 %v317, %v347
    %v398 = vadd.f32 %v318, %v351
    %v399 = vadd.f32 %v319, %v355
    %v400 = vadd.f32 %v320, %v359
    %v401 = vadd.f32 %v321, %v363
    %v402 = vadd.f32 %v322, %v367
    %v403 = vadd.f32 %v323, %v371
    %v404 = vadd.f32 %v324, %v375
    %v405 = vadd.f32 %v325, %v379
    %v406 = vadd.f32 %v326, %v383
    %v407 = vadd.f32 %v327, %v387
    %v408 = vadd.f32 %v328, %v391
    %v409 = vmax.f32 %v393, 0.0
    %v410 = vmax.f32 %v394, 0.0
    %v411 = vmax.f32 %v395, 0.0
    %v412 = vmax.f32 %v396, 0.0
    %v413 = vmax.f32 %v397, 0.0
    %v414 = vmax.f32 %v398, 0.0
    %v415 = vmax.f32 %v399, 0.0
    %v416 = vmax.f32 %v400, 0.0
    %v417 = vmax.f32 %v401, 0.0
    %v418 = vmax.f32 %v402, 0.0
    %v419 = vmax.f32 %v403, 0.0
    %v420 = vmax.f32 %v404, 0.0
    %v421 = vmax.f32 %v405, 0.0
    %v422 = vmax.f32 %v406, 0.0
    %v423 = vmax.f32 %v407, 0.0
    %v424 = vmax.f32 %v408, 0.0
    %425 = vset.pattern.permute.xlu0 4
    %426 = vperm.xlu0 %425, %v13
    %v427 = vpop.permute.xlu0 %426
    %429 = vset.pattern.permute.xlu0 4
    %430 = vperm.xlu0 %429, %v14
    %v431 = vpop.permute.xlu0 %430
    %433 = vset.pattern.permute.xlu0 4
    %434 = vperm.xlu0 %433, %v15
    %v435 = vpop.permute.xlu0 %434
    %437 = vset.pattern.permute.xlu0 4
    %438 = vperm.xlu0 %437, %v16
    %v439 = vpop.permute.xlu0 %438
    %441 = vset.pattern.permute.xlu0 4
    %442 = vperm.xlu0 %441, %v17
    %v443 = vpop.permute.xlu0 %442
    %445 = vset.pattern.permute.xlu0 4
    %446 = vperm.xlu0 %445, %v18
    %v447 = vpop.permute.xlu0 %446
    %449 = vset.pattern.permute.xlu0 4
    %450 = vperm.xlu0 %449, %v19
    %v451 = vpop.permute.xlu0 %450
    %453 = vset.pattern.permute.xlu0 4
    %454 = vperm.xlu0 %453, %v20
    %v455 = vpop.permute.xlu0 %454
    %457 = vset.pattern.permute.xlu0 4
    %458 = vperm.xlu0 %457, %v21
    %v459 = vpop.permute.xlu0 %458
    %461 = vset.pattern.permute.xlu0 4
    %462 = vperm.xlu0 %461, %v22
    %v463 = vpop.permute.xlu0 %462
    %465 = vset.pattern.permute.xlu0 4
    %466 = vperm.xlu0 %465, %v23
    %v467 = vpop.permute.xlu0 %466
    %469 = vset.pattern.permute.xlu0 4
    %470 = vperm.xlu0 %469, %v24
    %v471 = vpop.permute.xlu0 %470
    %473 = vset.pattern.permute.xlu0 4
    %474 = vperm.xlu0 %473, %v25
    %v475 = vpop.permute.xlu0 %474
    %477 = vset.pattern.permute.xlu0 4
    %478 = vperm.xlu0 %477, %v26
    %v479 = vpop.permute.xlu0 %478
    %481 = vset.pattern.permute.xlu0 4
    %482 = vperm.xlu0 %481, %v27
    %v483 = vpop.permute.xlu0 %482
    %485 = vset.pattern.permute.xlu0 4
    %486 = vperm.xlu0 %485, %v28
    %v487 = vpop.permute.xlu0 %486
    %v489 = vmul.f32 %v409, %v427
    %v490 = vmul.f32 %v410, %v431
    %v491 = vmul.f32 %v411, %v435
    %v492 = vmul.f32 %v412, %v439
    %v493 = vmul.f32 %v413, %v443
    %v494 = vmul.f32 %v414, %v447
    %v495 = vmul.f32 %v415, %v451
    %v496 = vmul.f32 %v416, %v455
    %v497 = vmul.f32 %v417, %v459
    %v498 = vmul.f32 %v418, %v463
    %v499 = vmul.f32 %v419, %v467
    %v500 = vmul.f32 %v420, %v471
    %v501 = vmul.f32 %v421, %v475
    %v502 = vmul.f32 %v422, %v479
    %v503 = vmul.f32 %v423, %v483
    %v504 = vmul.f32 %v424, %v487
    %v505 = vadd.f32 %v489, %v490
    %v506 = vadd.f32 %v505, %v491
    %v507 = vadd.f32 %v506, %v492
    %v508 = vadd.f32 %v507, %v493
    %v509 = vadd.f32 %v508, %v494
    %v510 = vadd.f32 %v509, %v495
    %v511 = vadd.f32 %v510, %v496
    %v512 = vadd.f32 %v511, %v497
    %v513 = vadd.f32 %v512, %v498
    %v514 = vadd.f32 %v513, %v499
    %v515 = vadd.f32 %v514, %v500
    %v516 = vadd.f32 %v515, %v501
    %v517 = vadd.f32 %v516, %v502
    %v518 = vadd.f32 %v517, %v503
    %v519 = vadd.f32 %v518, %v504
    %v520 = vrot.slane %v519, 4
    %v521 = vadd.f32 %v519, %v520
    %v522 = vrot.slane %v521, 2
    %v523 = vadd.f32 %v521, %v522
    %v524 = vrot.slane %v523, 1
    %v525 = vadd.f32 %v523, %v524
    %526 = vset.pattern.permute.xlu0 5
    %527 = vperm.xlu0 %526, %v13
    %v528 = vpop.permute.xlu0 %527
    %v530 = vadd.f32 %v525, %v528
    %531 = vst [vmem:[#allocation2] sm:$0x1] %v530
    // Predicated region
    $region10: #{tpu_custom_call.1} parent=1 // pred_check
      _
    $region11: #{tpu_custom_call.1} parent=1 // pred_check_branch
      %533 = sbr.rel (0) target = $region13
    $region12: #{tpu_custom_call.1} parent=1 // pred_region
      %s535 = ssub.s32 16, 16
      %536 = vsyncadd [#allocation3], %s535
      %s538 = sshll.u32 [#allocation2], 4
      %s539 = int_to_ptr.vmem [resolvable:$true] %s538
      %541 = dma.vmem_to_hbm [thread:$0]  %s539, 16, %s2, [#allocation3]
    $region13: #{tpu_custom_call.1} parent=1 // pred_fallthru
      _
    // Predicated region
    $region14: #{tpu_custom_call.1} parent=1 // pred_check
      _
    $region15: #{tpu_custom_call.1} parent=1 // pred_check_branch
      %543 = sbr.rel (0) target = $region17
    $region16: #{tpu_custom_call.1} parent=1 // pred_region
      %544 = dma.done [#allocation3], 16
    $region17: #{tpu_custom_call.1} parent=1 // pred_fallthru
      _
    %545 = vsyncpa [#allocation3], 1

</llo_original>
